<compile_context>
chip_gen: v5e
topology: v5e:2x2
jax: 0.10.0
libtpu: 0.0.40
codegen_flags: <defaults>
</compile_context>

<pallas_src>
import functools
import math

import jax
import jax.numpy as jnp
from jax.experimental import pallas as pl
from jax.experimental.pallas import tpu as pltpu

NEG_INF_FILL = -1e9  # matches torch masked_fill(mask == 0, -1000000000.0)
LANES = 128          # vreg lane width; m/l scratch is kept lane-replicated


def _attention_kernel(scale, has_mask, kv_len, *refs):
    if has_mask:
        q_ref, k_ref, v_ref, mask_ref, o_ref, q_sc, m_sc, l_sc, acc_sc = refs
    else:
        q_ref, k_ref, v_ref, o_ref, q_sc, m_sc, l_sc, acc_sc = refs

    ki = pl.program_id(2)
    kv_t = k_ref.shape[0]

    @pl.when(ki == 0)
    def _init():
        # Pre-scaled Q written once per q tile (hoisted out of the kv loop),
        # kept in the native input dtype so the MXU sees bf16 operands for
        # bf16 inputs.
        q_sc[...] = q_ref[...] * scale
        m_sc[...] = jnp.full_like(m_sc, -jnp.inf)
        l_sc[...] = jnp.zeros_like(l_sc)
        acc_sc[...] = jnp.zeros_like(acc_sc)

    # scores (q_t, kv_t): native-dtype operands, f32 MXU accumulation.
    s = jax.lax.dot_general(q_sc[...], k_ref[...],
                            (((1,), (1,)), ((), ())),
                            preferred_element_type=jnp.float32)

    if has_mask:
        s = jnp.where(mask_ref[...] == 0, NEG_INF_FILL, s)

    if kv_len is not None:
        # Sk was padded up to a multiple of kv_t: kill the padded key columns.
        col = jax.lax.broadcasted_iota(jnp.int32, s.shape, 1) + ki * kv_t
        s = jnp.where(col < kv_len, s, -jnp.inf)

    # online-softmax update; m/l are lane-replicated (q_t, 128) f32.
    m_prev = m_sc[...]
    row_max = jnp.max(s, axis=-1, keepdims=True)           # (q_t, 1)
    m_next = jnp.maximum(m_prev, row_max)                  # (q_t, LANES)
    alpha = jnp.exp(m_prev - m_next)                        # (q_t, LANES)
    p = jnp.exp(s - m_next[:, :1])                          # (q_t, kv_t) f32
    l_sc[...] = alpha * l_sc[...] + jnp.sum(p, axis=-1, keepdims=True)
    acc_sc[...] = alpha[:, :1] * acc_sc[...] + jax.lax.dot_general(
        p.astype(v_ref.dtype), v_ref[...],
        (((1,), (0,)), ((), ())), preferred_element_type=jnp.float32)
    m_sc[...] = m_next

    @pl.when(ki == pl.num_programs(2) - 1)
    def _finalize():
        inv_l = pl.reciprocal(l_sc[...], approx=True)       # EUP slot, ~free
        o_ref[...] = (acc_sc[...] * inv_l[:, :1]).astype(o_ref.dtype)


def _round_up(n, m):
    return ((n + m - 1) // m) * m


def _pick_tile(n, max_tile, step):
    """Tile size that is a multiple of `step` and <= max_tile.  Prefers large
    exact divisors of the (step-rounded) axis; otherwise returns max_tile and
    the caller pads the axis (always < one tile of padding)."""
    n_r = _round_up(n, step)
    if n_r <= max_tile:
        return n_r
    t = max(step, (max_tile // step) * step)
    lo = max(step, (max_tile // 2 // step) * step)
    while t >= lo:
        if n_r % t == 0:
            return t
        t -= step
    return max(step, (max_tile // step) * step)


def _chip_tuning():
    """Tile / VMEM defaults derived from the chip's VMEM capacity.
    128 MiB chips (v5e/v6e): bigger q tiles + generous scoped VMEM limit.
    64 MiB chips (v7x): tighter budget, kv tile capped at 512."""
    vmem_cap = 128 * 1024 * 1024
    try:
        info = pltpu.get_tpu_info()
        vmem_cap = int(getattr(info, "vmem_capacity_bytes", vmem_cap))
    except Exception:
        pass
    if vmem_cap >= 128 * 1024 * 1024:
        return 1024, 512, 96 * 1024 * 1024
    return 512, 512, 44 * 1024 * 1024


def self_attention(query, key, value, mask=None, *,
                   max_q_tile=None, max_kv_tile=None, vmem_limit_bytes=None):
    """query/key: (B, H, S, Dk); value: (B, H, S, Dv); mask: (B, Sq, Sk) or None."""
    B, H, Sq, Dk = query.shape
    Sk = key.shape[2]
    Dv = value.shape[3]
    assert key.shape == (B, H, Sk, Dk)
    assert value.shape == (B, H, Sk, Dv)
    if mask is not None:
        assert mask.shape == (B, Sq, Sk)

    tq_max, tkv_max, vmem_dflt = _chip_tuning()
    max_q_tile = tq_max if max_q_tile is None else max_q_tile
    max_kv_tile = tkv_max if max_kv_tile is None else max_kv_tile
    vmem_limit_bytes = vmem_dflt if vmem_limit_bytes is None else vmem_limit_bytes

    scale = 1.0 / math.sqrt(Dk)

    # Tiles: q_t multiple of 8, kv_t multiple of 128 (kv_t is the lane dim of
    # s/p and the contraction dim of P@V).  Pad the sequence axes instead of
    # ever falling back to a full-axis tile.
    q_t = _pick_tile(Sq, max_q_tile, 8)
    kv_t = _pick_tile(Sk, max_kv_tile, 128)
    Sq_p = _round_up(Sq, q_t)
    Sk_p = _round_up(Sk, kv_t)

    q2 = query.reshape(B * H, Sq, Dk)
    k2 = key.reshape(B * H, Sk, Dk)
    v2 = value.reshape(B * H, Sk, Dv)
    if Sq_p != Sq:
        q2 = jnp.pad(q2, ((0, 0), (0, Sq_p - Sq), (0, 0)))
    if Sk_p != Sk:
        k2 = jnp.pad(k2, ((0, 0), (0, Sk_p - Sk), (0, 0)))
        v2 = jnp.pad(v2, ((0, 0), (0, Sk_p - Sk), (0, 0)))

    # NOTE(v7x): B*H*(Sq_p//q_t) should be >= 2 (ideally even) so both
    # TensorCores get balanced work under the "parallel" grid axes.
    grid = (B * H, Sq_p // q_t, Sk_p // kv_t)

    in_specs = [
        pl.BlockSpec((pl.Squeezed(), q_t, Dk), lambda bh, qi, ki: (bh, qi, 0)),
        # If K/V DMA shows up exposed on v6e at bf16, add
        # pipeline_mode=pl.Buffered(3) to these two specs.
        pl.BlockSpec((pl.Squeezed(), kv_t, Dk), lambda bh, qi, ki: (bh, ki, 0)),
        pl.BlockSpec((pl.Squeezed(), kv_t, Dv), lambda bh, qi, ki: (bh, ki, 0)),
    ]
    args = [q2, k2, v2]
    if mask is not None:
        # int8 "keep" mask: 4x less HBM traffic than int32.
        # TODO(synk): the same (q_t, kv_t) mask tile is still re-fetched once
        # per head (index bh // H); fusing heads into one block would fix it.
        m8 = (mask != 0).astype(jnp.int8)
        if Sq_p != Sq or Sk_p != Sk:
            m8 = jnp.pad(m8, ((0, 0), (0, Sq_p - Sq), (0, Sk_p - Sk)))
        in_specs.append(
            pl.BlockSpec((pl.Squeezed(), q_t, kv_t),
                         lambda bh, qi, ki: (bh // H, qi, ki)))
        args.append(m8)

    kv_len = Sk if Sk_p != Sk else None

    out = pl.pallas_call(
        functools.partial(_attention_kernel, scale, mask is not None, kv_len),
        out_shape=jax.ShapeDtypeStruct((B * H, Sq_p, Dv), query.dtype),
        grid_spec=pltpu.PrefetchScalarGridSpec(
            num_scalar_prefetch=0,
            grid=grid,
            in_specs=in_specs,
            out_specs=pl.BlockSpec((pl.Squeezed(), q_t, Dv),
                                   lambda bh, qi, ki: (bh, qi, 0)),
            scratch_shapes=[
                pltpu.VMEM((q_t, Dk), query.dtype),      # pre-scaled Q (hoisted)
                pltpu.VMEM((q_t, LANES), jnp.float32),   # running max m
                pltpu.VMEM((q_t, LANES), jnp.float32),   # running denom l
                pltpu.VMEM((q_t, Dv), jnp.float32),      # running accumulator
            ],
        ),
        compiler_params=pltpu.CompilerParams(
            dimension_semantics=("parallel", "parallel", "arbitrary"),
            vmem_limit_bytes=vmem_limit_bytes,
        ),
    )(*args)
    # TODO(synk): dropout (p=0.1) on the attention weights is omitted — it is
    # identity at inference; training-mode dropout would need pltpu.prng_* here.
    out = out[:, :Sq, :] if Sq_p != Sq else out
    return out.reshape(B, H, Sq, Dv)


if __name__ == "__main__":
    batch, heads, seq, dim = 2, 2, 8, 32

    root = jax.random.PRNGKey(0)
    kq, kk, kv = jax.random.split(root, 3)
    q = jax.random.normal(kq, (batch, heads, seq, dim), dtype=jnp.float32)
    k = jax.random.normal(kk, (batch, heads, seq, dim), dtype=jnp.float32)
    v = jax.random.normal(kv, (batch, heads, seq, dim), dtype=jnp.float32)

    def ref_attn(q, k, v, mask=None):
        dk = k.shape[-1]
        s = jnp.einsum("bhqd,bhkd->bhqk",
                       (q / jnp.sqrt(jnp.float32(dk))).astype(jnp.float32),
                       k.astype(jnp.float32))
        if mask is not None:
            s = jnp.where(mask[:, None, :, :] == 0, NEG_INF_FILL, s)
        p = jax.nn.softmax(s, axis=-1)
        return jnp.einsum("bhqk,bhkd->bhqd", p, v.astype(jnp.float32))

    # unmasked path (mask=None, matches the module default)
    out = jax.block_until_ready(self_attention(q, k, v))
    ref = ref_attn(q, k, v)
    assert out.shape == ref.shape
    assert jnp.allclose(out, ref, atol=2e-3, rtol=2e-3), "unmasked mismatch"

    # masked path (causal mask, broadcast over heads like mask.unsqueeze(1))
    mask = jnp.broadcast_to(
        jnp.tril(jnp.ones((seq, seq), dtype=jnp.int32)), (batch, seq, seq))
    out_m = jax.block_until_ready(self_attention(q, k, v, mask))
    ref_m = ref_attn(q, k, v, mask)
    assert jnp.allclose(out_m, ref_m, atol=2e-3, rtol=2e-3), "masked mismatch"

    # bf16 smoke run: exercises the native-dtype (no f32 upcast) MXU path.
    out_bf = jax.block_until_ready(
        self_attention(q.astype(jnp.bfloat16), k.astype(jnp.bfloat16),
                       v.astype(jnp.bfloat16), mask))
    assert out_bf.dtype == jnp.bfloat16
    assert bool(jnp.all(jnp.isfinite(out_bf.astype(jnp.float32)))), "bf16 non-finite"

    print("KERNEL_OK")
</pallas_src>

<mosaic_0001>
module attributes {stable_mosaic.version = 11 : i64} {
  func.func @_attention_kernel(%arg0: i32, %arg1: i32, %arg2: i32, %arg3: memref<1x8x32xf32, #tpu.memory_space<vmem>>, %arg4: memref<1x128x32xf32, #tpu.memory_space<vmem>>, %arg5: memref<1x128x32xf32, #tpu.memory_space<vmem>>, %arg6: memref<1x8x32xf32, #tpu.memory_space<vmem>>, %arg7: memref<8x32xf32, #tpu.memory_space<vmem>>, %arg8: memref<8x128xf32, #tpu.memory_space<vmem>>, %arg9: memref<8x128xf32, #tpu.memory_space<vmem>>, %arg10: memref<8x32xf32, #tpu.memory_space<vmem>>) attributes {dimension_semantics = [#tpu.dimension_semantics<parallel>, #tpu.dimension_semantics<parallel>, #tpu.dimension_semantics<arbitrary>], iteration_bounds = array<i64: 4, 1, 1>, scalar_prefetch = 0 : i64, scratch_operands = 4 : i64, tpu.core_type = #tpu.core_type<tc>, window_params = [{transform_indices = @transform_0, window_bounds = array<i64: 1, 8, 32>}, {transform_indices = @transform_1, window_bounds = array<i64: 1, 128, 32>}, {transform_indices = @transform_2, window_bounds = array<i64: 1, 128, 32>}, {transform_indices = @transform_3, window_bounds = array<i64: 1, 8, 32>}]} {
    %c0_i32 = arith.constant 0 : i32
    %0 = arith.cmpi eq, %arg2, %c0_i32 : i32
    %1 = arith.extui %0 : i1 to i32
    %c0_i32_0 = arith.constant 0 : i32
    %2 = arith.cmpi ne, %1, %c0_i32_0 : i32
    scf.if %2 {
      %c0_26 = arith.constant 0 : index
      %c0_27 = arith.constant 0 : index
      %c0_28 = arith.constant 0 : index
      %46 = vector.load %arg3[%c0_26, %c0_27, %c0_28] : memref<1x8x32xf32, #tpu.memory_space<vmem>>, vector<1x8x32xf32>
      %47 = vector.shape_cast %46 : vector<1x8x32xf32> to vector<8x32xf32>
      %cst_29 = arith.constant 0.176776692 : f32
      %48 = vector.broadcast %cst_29 : f32 to vector<8x32xf32>
      %49 = arith.mulf %47, %48 : vector<8x32xf32>
      %c0_30 = arith.constant 0 : index
      %c0_31 = arith.constant 0 : index
      %50 = vector.load %arg7[%c0_30, %c0_31] : memref<8x32xf32, #tpu.memory_space<vmem>>, vector<8x32xf32>
      tpu.vector_store %arg7[%c0_30, %c0_31], %49 {strides = array<i32>} : memref<8x32xf32, #tpu.memory_space<vmem>>, vector<8x32xf32>,
      %cst_32 = arith.constant 0xFF800000 : f32
      %51 = vector.broadcast %cst_32 : f32 to vector<8x128xf32>
      %c0_33 = arith.constant 0 : index
      %c0_34 = arith.constant 0 : index
      %52 = vector.load %arg8[%c0_33, %c0_34] : memref<8x128xf32, #tpu.memory_space<vmem>>, vector<8x128xf32>
      tpu.vector_store %arg8[%c0_33, %c0_34], %51 {strides = array<i32>} : memref<8x128xf32, #tpu.memory_space<vmem>>, vector<8x128xf32>,
      %cst_35 = arith.constant 0.000000e+00 : f32
      %53 = vector.broadcast %cst_35 : f32 to vector<8x128xf32>
      %c0_36 = arith.constant 0 : index
      %c0_37 = arith.constant 0 : index
      %54 = vector.load %arg9[%c0_36, %c0_37] : memref<8x128xf32, #tpu.memory_space<vmem>>, vector<8x128xf32>
      tpu.vector_store %arg9[%c0_36, %c0_37], %53 {strides = array<i32>} : memref<8x128xf32, #tpu.memory_space<vmem>>, vector<8x128xf32>,
      %cst_38 = arith.constant 0.000000e+00 : f32
      %55 = vector.broadcast %cst_38 : f32 to vector<8x32xf32>
      %c0_39 = arith.constant 0 : index
      %c0_40 = arith.constant 0 : index
      %56 = vector.load %arg10[%c0_39, %c0_40] : memref<8x32xf32, #tpu.memory_space<vmem>>, vector<8x32xf32>
      tpu.vector_store %arg10[%c0_39, %c0_40], %55 {strides = array<i32>} : memref<8x32xf32, #tpu.memory_space<vmem>>, vector<8x32xf32>,
    } else {
    }
    %c0 = arith.constant 0 : index
    %c0_1 = arith.constant 0 : index
    %3 = vector.load %arg7[%c0, %c0_1] : memref<8x32xf32, #tpu.memory_space<vmem>>, vector<8x32xf32>
    %c0_2 = arith.constant 0 : index
    %c0_3 = arith.constant 0 : index
    %c0_4 = arith.constant 0 : index
    %4 = vector.load %arg4[%c0_2, %c0_3, %c0_4] : memref<1x128x32xf32, #tpu.memory_space<vmem>>, vector<1x128x32xf32>
    %5 = vector.shape_cast %4 : vector<1x128x32xf32> to vector<128x32xf32>
    %cst = arith.constant dense<0.000000e+00> : vector<8x128xf32>
    %6 = tpu.matmul %3, %5, %cst {dimension_numbers = #tpu.dot_dimension_numbers<[1], [1], [0], [0], [0, 0, 1, 0], [], []>} : vector<8x32xf32>, vector<128x32xf32>, vector<8x128xf32> -> vector<8x128xf32>
    %7 = tpu.iota {dimensions = array<i32: 1>} : vector<8x128xi32>
    %c128_i32 = arith.constant 128 : i32
    %8 = arith.muli %arg2, %c128_i32 : i32
    %9 = vector.broadcast %8 : i32 to vector<8x128xi32>
    %10 = arith.addi %7, %9 : vector<8x128xi32>
    %c8_i32 = arith.constant 8 : i32
    %11 = vector.broadcast %c8_i32 : i32 to vector<8x128xi32>
    %12 = arith.cmpi slt, %10, %11 : vector<8x128xi32>
    %cst_5 = arith.constant 0xFF800000 : f32
    %13 = vector.broadcast %cst_5 : f32 to vector<8x128xf32>
    %14 = arith.select %12, %6, %13 : vector<8x128xi1>, vector<8x128xf32>
    %c0_6 = arith.constant 0 : index
    %c0_7 = arith.constant 0 : index
    %15 = vector.load %arg8[%c0_6, %c0_7] : memref<8x128xf32, #tpu.memory_space<vmem>>, vector<8x128xf32>
    %cst_8 = arith.constant dense<0xFF800000> : vector<8xf32>
    %16 = vector.multi_reduction <maximumf>, %14, %cst_8 [1] : vector<8x128xf32> to vector<8xf32>
    %17 = vector.shape_cast %16 : vector<8xf32> to vector<8x1xf32>
    %18 = vector.broadcast %17 : vector<8x1xf32> to vector<8x128xf32>
    %19 = arith.maximumf %15, %18 : vector<8x128xf32>
    %20 = arith.subf %15, %19 : vector<8x128xf32>
    %21 = math.exp %20 : vector<8x128xf32>
    %22 = vector.extract_strided_slice %19 {offsets = [0, 0], sizes = [8, 1], strides = [1, 1]} : vector<8x128xf32> to vector<8x1xf32>
    %23 = vector.broadcast %22 : vector<8x1xf32> to vector<8x128xf32>
    %24 = arith.subf %14, %23 : vector<8x128xf32>
    %25 = math.exp %24 : vector<8x128xf32>
    %c0_9 = arith.constant 0 : index
    %c0_10 = arith.constant 0 : index
    %26 = vector.load %arg9[%c0_9, %c0_10] : memref<8x128xf32, #tpu.memory_space<vmem>>, vector<8x128xf32>
    %27 = arith.mulf %21, %26 : vector<8x128xf32>
    %cst_11 = arith.constant dense<0.000000e+00> : vector<8xf32>
    %28 = vector.multi_reduction <add>, %25, %cst_11 [1] : vector<8x128xf32> to vector<8xf32>
    %29 = vector.shape_cast %28 : vector<8xf32> to vector<8x1xf32>
    %30 = vector.broadcast %29 : vector<8x1xf32> to vector<8x128xf32>
    %31 = arith.addf %27, %30 : vector<8x128xf32>
    %c0_12 = arith.constant 0 : index
    %c0_13 = arith.constant 0 : index
    %32 = vector.load %arg9[%c0_12, %c0_13] : memref<8x128xf32, #tpu.memory_space<vmem>>, vector<8x128xf32>
    tpu.vector_store %arg9[%c0_12, %c0_13], %31 {strides = array<i32>} : memref<8x128xf32, #tpu.memory_space<vmem>>, vector<8x128xf32>,
    %33 = vector.extract_strided_slice %21 {offsets = [0, 0], sizes = [8, 1], strides = [1, 1]} : vector<8x128xf32> to vector<8x1xf32>
    %c0_14 = arith.constant 0 : index
    %c0_15 = arith.constant 0 : index
    %34 = vector.load %arg10[%c0_14, %c0_15] : memref<8x32xf32, #tpu.memory_space<vmem>>, vector<8x32xf32>
    %35 = vector.broadcast %33 : vector<8x1xf32> to vector<8x32xf32>
    %36 = arith.mulf %35, %34 : vector<8x32xf32>
    %c0_16 = arith.constant 0 : index
    %c0_17 = arith.constant 0 : index
    %c0_18 = arith.constant 0 : index
    %37 = vector.load %arg5[%c0_16, %c0_17, %c0_18] : memref<1x128x32xf32, #tpu.memory_space<vmem>>, vector<1x128x32xf32>
    %38 = vector.shape_cast %37 : vector<1x128x32xf32> to vector<128x32xf32>
    %cst_19 = arith.constant dense<0.000000e+00> : vector<8x32xf32>
    %39 = tpu.matmul %25, %38, %cst_19 {dimension_numbers = #tpu.dot_dimension_numbers<[1], [0], [0], [1], [0, 0, 1, 1], [], []>} : vector<8x128xf32>, vector<128x32xf32>, vector<8x32xf32> -> vector<8x32xf32>
    %40 = arith.addf %36, %39 : vector<8x32xf32>
    %c0_20 = arith.constant 0 : index
    %c0_21 = arith.constant 0 : index
    %41 = vector.load %arg10[%c0_20, %c0_21] : memref<8x32xf32, #tpu.memory_space<vmem>>, vector<8x32xf32>
    tpu.vector_store %arg10[%c0_20, %c0_21], %40 {strides = array<i32>} : memref<8x32xf32, #tpu.memory_space<vmem>>, vector<8x32xf32>,
    %c0_22 = arith.constant 0 : index
    %c0_23 = arith.constant 0 : index
    %42 = vector.load %arg8[%c0_22, %c0_23] : memref<8x128xf32, #tpu.memory_space<vmem>>, vector<8x128xf32>
    tpu.vector_store %arg8[%c0_22, %c0_23], %19 {strides = array<i32>} : memref<8x128xf32, #tpu.memory_space<vmem>>, vector<8x128xf32>,
    %c0_i32_24 = arith.constant 0 : i32
    %43 = arith.cmpi eq, %arg2, %c0_i32_24 : i32
    %44 = arith.extui %43 : i1 to i32
    %c0_i32_25 = arith.constant 0 : i32
    %45 = arith.cmpi ne, %44, %c0_i32_25 : i32
    scf.if %45 {
      %c0_26 = arith.constant 0 : index
      %c0_27 = arith.constant 0 : index
      %46 = vector.load %arg9[%c0_26, %c0_27] : memref<8x128xf32, #tpu.memory_space<vmem>>, vector<8x128xf32>
      %47 = tpu.reciprocal %46 {approx = true} : vector<8x128xf32> -> vector<8x128xf32>
      %c0_28 = arith.constant 0 : index
      %c0_29 = arith.constant 0 : index
      %48 = vector.load %arg10[%c0_28, %c0_29] : memref<8x32xf32, #tpu.memory_space<vmem>>, vector<8x32xf32>
      %49 = vector.extract_strided_slice %47 {offsets = [0, 0], sizes = [8, 1], strides = [1, 1]} : vector<8x128xf32> to vector<8x1xf32>
      %50 = vector.broadcast %49 : vector<8x1xf32> to vector<8x32xf32>
      %51 = arith.mulf %48, %50 : vector<8x32xf32>
      %c0_30 = arith.constant 0 : index
      %c0_31 = arith.constant 0 : index
      %c0_32 = arith.constant 0 : index
      %52 = vector.load %arg6[%c0_30, %c0_31, %c0_32] : memref<1x8x32xf32, #tpu.memory_space<vmem>>, vector<1x8x32xf32>
      %53 = vector.shape_cast %52 : vector<1x8x32xf32> to vector<8x32xf32>
      %54 = vector.shape_cast %51 : vector<8x32xf32> to vector<1x8x32xf32>
      tpu.vector_store %arg6[%c0_30, %c0_31, %c0_32], %54 {strides = array<i32>} : memref<1x8x32xf32, #tpu.memory_space<vmem>>, vector<1x8x32xf32>,
    } else {
    }
    return
  }
  func.func @transform_0(%arg0: i32, %arg1: i32, %arg2: i32) -> (i32, i32, i32) {
    %c0_i32 = arith.constant 0 : i32
    %c0_i32_0 = arith.constant 0 : i32
    return %arg0, %arg1, %c0_i32 : i32, i32, i32
  }
  func.func @transform_1(%arg0: i32, %arg1: i32, %arg2: i32) -> (i32, i32, i32) {
    %c0_i32 = arith.constant 0 : i32
    %c0_i32_0 = arith.constant 0 : i32
    return %arg0, %arg2, %c0_i32 : i32, i32, i32
  }
  func.func @transform_2(%arg0: i32, %arg1: i32, %arg2: i32) -> (i32, i32, i32) {
    %c0_i32 = arith.constant 0 : i32
    %c0_i32_0 = arith.constant 0 : i32
    return %arg0, %arg2, %c0_i32 : i32, i32, i32
  }
  func.func @transform_3(%arg0: i32, %arg1: i32, %arg2: i32) -> (i32, i32, i32) {
    %c0_i32 = arith.constant 0 : i32
    %c0_i32_0 = arith.constant 0 : i32
    return %arg0, %arg1, %c0_i32 : i32, i32, i32
  }
}

</mosaic_0001>

<llo_original>
// kernel: tpu_custom_call.1
$region0: #{tpu_custom_call.1}
  #allocation0 [shape = 'u32[]', space=smem, size = 0x4, offset = 0x4, fixed_abs, tag = 'smem constant byte address 0x4 - core index']
  #allocation1 [shape = 'u32[72,128]{1,0:T(1,128)}', space=vmem, size = 0x9000, scoped, tag = 'internal scratch']
  #allocation2 [shape = 'f32[8,32]{1,0:T(8,128)}', space=vmem, size = 0x1000, scoped, tag = 'scratch operand']
  #allocation3 [shape = 'f32[8,128]{1,0:T(8,128)}', space=vmem, size = 0x1000, scoped, tag = 'scratch operand']
  #allocation4 [shape = 'f32[8,128]{1,0:T(8,128)}', space=vmem, size = 0x1000, scoped, tag = 'scratch operand']
  #allocation5 [shape = 'f32[8,32]{1,0:T(8,128)}', space=vmem, size = 0x1000, scoped, tag = 'scratch operand']
  %s0 = inlined_call_operand.vmem [shape: f32[4,8,32], index: 0, kind: input, shape index: {}]
  %s1 = inlined_call_operand.vmem [shape: f32[4,128,32], index: 1, kind: input, shape index: {}]
  %s2 = inlined_call_operand.vmem [shape: f32[4,128,32], index: 2, kind: input, shape index: {}]
  %s3 = inlined_call_operand.hbm [shape: f32[4,8,32], index: 3, kind: output, shape index: {}]
  %s4 = sld [smem:[#allocation0]]
  $region53: #{tpu_custom_call.1} parent=0
    _
  %s6 = ssub.s32 1, %s4
  %s7 = scalar_select 0, %s6, %s4
  $region1: #{tpu_custom_call.1} parent=0
    #allocation6 [shape = 'u8[8192]{0}', space=vmem, size = 0x2000, scoped, tag = 'output window, operand 0']
    #allocation7 [shape = 's32[2]{0}', space=sflag, size = 0x8, scoped, tag = 'scoped memory for tpu_custom_call.1']
    %8 = vsyncpa [#allocation7], 0
    %s9 = scalar_lea.sflag [#allocation7], 1
    %10 = vsyncpa %s9, 0
    loop: start=0, step=1, limit=6
    $region2: #{tpu_custom_call.1} parent=1 // loop_pre_header
      _
    $region3: #{tpu_custom_call.1} parent=1 // loop_header
      %s12 = sphi 0, %s16
      %p13 = scmp.ge.s32.totalorder %s12, 6
      %s19 = sphi 0, %s38
      %s20 = sphi 0, %s34
      %s21 = sphi 0, %s30
      %s22 = sphi 0, %s19
      %s23 = sphi 0, %s20
      %s24 = sphi 0, %s21
      %s25 = sphi 0, %s22
      %s26 = sphi 0, %s23
      %s27 = sphi 0, %s24
      %s43 = sphi 0, %s45
      %s46 = sphi 0, %s43
      %s47 = sphi 0, %s46
      %s63 = sphi 0, %s47
      %s71 = sphi 0, %s73
      %s74 = sphi 0, %s71
      %s75 = sphi 0, %s74
      %s91 = sphi 0, %s75
      %s99 = sphi 0, %s101
      %s102 = sphi 0, %s99
      %s103 = sphi 0, %s102
      %s119 = sphi 0, %s103
      %s127 = sphi 0, %s129
      %s130 = sphi 0, %s127
      %s131 = sphi 0, %s130
      %s147 = sphi 0, %s131
    $region4: #{tpu_custom_call.1} parent=1 // loop_header_branch
      %15 = sbr.rel (%p13) target = $region8
    $region5: #{tpu_custom_call.1} parent=1 // loop_body
      %s17 = ssub.s32 %s12, 1
      %s18 = ssub.s32 %s12, 2
      %s28 = sadd.s32 1, %s21
      %p29 = scmp.ge.s32.totalorder %s28, 1
      %s30 = scalar_select %p29, 0, %s28
      %s31 = sadd.s32 1, %s20
      %s32 = scalar_select %p29, %s31, %s20
      %p33 = scmp.ge.s32.totalorder %s32, 1
      %s34 = scalar_select %p33, 0, %s32
      %s35 = sadd.s32 1, %s19
      %s36 = scalar_select %p33, %s35, %s19
      %p37 = scmp.ge.s32.totalorder %s36, 4
      %s38 = scalar_select %p37, 0, %s36
      %s39 = ssub.s32 %s19, %s38
      %s40 = ssub.s32 %s20, %s34
      %s41 = sor.u32 %s39, %s40
      %p42 = scmp.eq.s32.totalorder %s41, 0
      %s44 = sadd.s32 %s43, 1
      %s45 = scalar_select %p42, %s43, %s44
      %p48 = pneg %p42
      %p49 = scmp.eq.s32.totalorder %s12, 3
      %p50 = por %p48, %p49
      %p51 = scmp.ne.s32.totalorder %s43, %s46
      %p52 = scmp.eq.s32.totalorder %s12, 0
      %p53 = por %p51, %p52
      %p54 = scmp.ne.s32.totalorder %s43, %s46
      %p55 = scmp.eq.s32.totalorder %s17, 3
      %p56 = por %p54, %p55
      %p57 = scmp.ne.s32.totalorder %s46, %s47
      %p58 = scmp.eq.s32.totalorder %s17, 0
      %p59 = por %p57, %p58
      %p60 = scmp.ne.s32.totalorder %s46, %s47
      %p61 = scmp.eq.s32.totalorder %s18, 3
      %p62 = por %p60, %p61
      %p64 = scmp.ne.s32.totalorder %s47, %s63
      %p65 = scmp.eq.s32.totalorder %s18, 0
      %p66 = por %p64, %p65
      %s67 = ssub.s32 %s19, %s38
      %s68 = ssub.s32 %s21, %s30
      %s69 = sor.u32 %s67, %s68
      %p70 = scmp.eq.s32.totalorder %s69, 0
      %s72 = sadd.s32 %s71, 1
      %s73 = scalar_select %p70, %s71, %s72
      %p76 = pneg %p70
      %p77 = scmp.eq.s32.totalorder %s12, 3
      %p78 = por %p76, %p77
      %p79 = scmp.ne.s32.totalorder %s71, %s74
      %p80 = scmp.eq.s32.totalorder %s12, 0
      %p81 = por %p79, %p80
      %p82 = scmp.ne.s32.totalorder %s71, %s74
      %p83 = scmp.eq.s32.totalorder %s17, 3
      %p84 = por %p82, %p83
      %p85 = scmp.ne.s32.totalorder %s74, %s75
      %p86 = scmp.eq.s32.totalorder %s17, 0
      %p87 = por %p85, %p86
      %p88 = scmp.ne.s32.totalorder %s74, %s75
      %p89 = scmp.eq.s32.totalorder %s18, 3
      %p90 = por %p88, %p89
      %p92 = scmp.ne.s32.totalorder %s75, %s91
      %p93 = scmp.eq.s32.totalorder %s18, 0
      %p94 = por %p92, %p93
      %s95 = ssub.s32 %s19, %s38
      %s96 = ssub.s32 %s21, %s30
      %s97 = sor.u32 %s95, %s96
      %p98 = scmp.eq.s32.totalorder %s97, 0
      %s100 = sadd.s32 %s99, 1
      %s101 = scalar_select %p98, %s99, %s100
      %p104 = pneg %p98
      %p105 = scmp.eq.s32.totalorder %s12, 3
      %p106 = por %p104, %p105
      %p107 = scmp.ne.s32.totalorder %s99, %s102
      %p108 = scmp.eq.s32.totalorder %s12, 0
      %p109 = por %p107, %p108
      %p110 = scmp.ne.s32.totalorder %s99, %s102
      %p111 = scmp.eq.s32.totalorder %s17, 3
      %p112 = por %p110, %p111
      %p113 = scmp.ne.s32.totalorder %s102, %s103
      %p114 = scmp.eq.s32.totalorder %s17, 0
      %p115 = por %p113, %p114
      %p116 = scmp.ne.s32.totalorder %s102, %s103
      %p117 = scmp.eq.s32.totalorder %s18, 3
      %p118 = por %p116, %p117
      %p120 = scmp.ne.s32.totalorder %s103, %s119
      %p121 = scmp.eq.s32.totalorder %s18, 0
      %p122 = por %p120, %p121
      %s123 = ssub.s32 %s19, %s38
      %s124 = ssub.s32 %s20, %s34
      %s125 = sor.u32 %s123, %s124
      %p126 = scmp.eq.s32.totalorder %s125, 0
      %s128 = sadd.s32 %s127, 1
      %s129 = scalar_select %p126, %s127, %s128
      %p132 = pneg %p126
      %p133 = scmp.eq.s32.totalorder %s12, 3
      %p134 = por %p132, %p133
      %p135 = scmp.ne.s32.totalorder %s127, %s130
      %p136 = scmp.eq.s32.totalorder %s12, 0
      %p137 = por %p135, %p136
      %p138 = scmp.ne.s32.totalorder %s127, %s130
      %p139 = scmp.eq.s32.totalorder %s17, 3
      %p140 = por %p138, %p139
      %p141 = scmp.ne.s32.totalorder %s130, %s131
      %p142 = scmp.eq.s32.totalorder %s17, 0
      %p143 = por %p141, %p142
      %p144 = scmp.ne.s32.totalorder %s130, %s131
      %p145 = scmp.eq.s32.totalorder %s18, 3
      %p146 = por %p144, %p145
      %p148 = scmp.ne.s32.totalorder %s131, %s147
      %p149 = scmp.eq.s32.totalorder %s18, 0
      %p150 = por %p148, %p149
      %p151 = scmp.le.s32.totalorder 1, %s12
      %p152 = scmp.lt.s32.totalorder %s12, 5
      %p153 = pnand %p151, %p152
      %p154 = pneg %p153
      // Predicated region
      $region9: #{tpu_custom_call.1} parent=5 // pred_check
        _
      $region10: #{tpu_custom_call.1} parent=5 // pred_check_branch
        %156 = sbr.rel (%p153) target = $region12
      $region11: #{tpu_custom_call.1} parent=5 // pred_region
        %s157 = ssub.s32 %s12, 1
      $region12: #{tpu_custom_call.1} parent=5 // pred_fallthru
        _
      %p158 = scmp.lt.s32.totalorder %s12, 4
      // Predicated region
      $region13: #{tpu_custom_call.1} parent=5 // pred_check
        %p159 = pneg %p158
      $region14: #{tpu_custom_call.1} parent=5 // pred_check_branch
        %161 = sbr.rel (%p159) target = $region16
      $region15: #{tpu_custom_call.1} parent=5 // pred_region
        // Predicated region
        $region17: #{tpu_custom_call.1} parent=15 // pred_check
          %p162 = pneg %p53
        $region18: #{tpu_custom_call.1} parent=15 // pred_check_branch
          %164 = sbr.rel (%p162) target = $region20
        $region19: #{tpu_custom_call.1} parent=15 // pred_region
          %p165 = scmp.lt.s32.totalorder %s19, 3
          %s166 = scalar_select %p165, %s19, 3
          %p167 = scmp.lt.s32.totalorder %s20, 0
          %s168 = scalar_select %p167, %s20, 0
          %s169 = sadd.s32 %s168, %s166
          %s170 = smul.addr %s169, 8
          %s171 = scalar_lea.vmem %s0, %s170
        $region20: #{tpu_custom_call.1} parent=15 // pred_fallthru
          _
        // Predicated region
        $region21: #{tpu_custom_call.1} parent=15 // pred_check
          %p172 = pneg %p81
        $region22: #{tpu_custom_call.1} parent=15 // pred_check_branch
          %174 = sbr.rel (%p172) target = $region24
        $region23: #{tpu_custom_call.1} parent=15 // pred_region
          %s175 = smul.u32 16, %s21
          %p176 = scmp.lt.s32.totalorder %s19, 3
          %s177 = scalar_select %p176, %s19, 3
          %p178 = scmp.lt.s32.totalorder %s175, 15
          %s179 = scalar_select %p178, %s175, 15
          %s180 = smul.addr %s177, 16
          %s181 = sadd.s32 %s179, %s180
          %s182 = smul.addr %s181, 8
          %s183 = scalar_lea.vmem %s1, %s182
          %s184 = smul.u32 16, %s21
        $region24: #{tpu_custom_call.1} parent=15 // pred_fallthru
          _
        // Predicated region
        $region25: #{tpu_custom_call.1} parent=15 // pred_check
          %p185 = pneg %p109
        $region26: #{tpu_custom_call.1} parent=15 // pred_check_branch
          %187 = sbr.rel (%p185) target = $region28
        $region27: #{tpu_custom_call.1} parent=15 // pred_region
          %s188 = smul.u32 16, %s21
          %p189 = scmp.lt.s32.totalorder %s19, 3
          %s190 = scalar_select %p189, %s19, 3
          %p191 = scmp.lt.s32.totalorder %s188, 15
          %s192 = scalar_select %p191, %s188, 15
          %s193 = smul.addr %s190, 16
          %s194 = sadd.s32 %s192, %s193
          %s195 = smul.addr %s194, 8
          %s196 = scalar_lea.vmem %s2, %s195
          %s197 = smul.u32 16, %s21
        $region28: #{tpu_custom_call.1} parent=15 // pred_fallthru
          _
      $region16: #{tpu_custom_call.1} parent=5 // pred_fallthru
        _
      %p198 = scmp.le.s32.totalorder 1, %s12
      %p199 = scmp.lt.s32.totalorder %s12, 5
      %p200 = pnand %p198, %p199
      %p201 = pneg %p200
      // Predicated region
      $region29: #{tpu_custom_call.1} parent=5 // pred_check
        _
      $region30: #{tpu_custom_call.1} parent=5 // pred_check_branch
        %203 = sbr.rel (%p200) target = $region32
      $region31: #{tpu_custom_call.1} parent=5 // pred_region
        %s204 = ssub.s32 %s12, 1
        %p205 = scmp.lt.s32.totalorder %s22, 3
        %s206 = scalar_select %p205, %s22, 3
        %p207 = scmp.lt.s32.totalorder %s23, 0
        %s208 = scalar_select %p207, %s23, 0
        %s209 = sadd.s32 %s208, %s206
        %s210 = smul.addr %s209, 8
        %s211 = scalar_lea.vmem %s0, %s210
        %p212 = pneg %p59
        %p213 = pneg %p56
        %s214 = smul.u32 16, %s24
        %p215 = scmp.lt.s32.totalorder %s22, 3
        %s216 = scalar_select %p215, %s22, 3
        %p217 = scmp.lt.s32.totalorder %s214, 15
        %s218 = scalar_select %p217, %s214, 15
        %s219 = smul.addr %s216, 16
        %s220 = sadd.s32 %s218, %s219
        %s221 = smul.addr %s220, 8
        %s222 = scalar_lea.vmem %s1, %s221
        %p223 = pneg %p87
        %p224 = pneg %p84
        %s225 = smul.u32 16, %s24
        %p226 = scmp.lt.s32.totalorder %s22, 3
        %s227 = scalar_select %p226, %s22, 3
        %p228 = scmp.lt.s32.totalorder %s225, 15
        %s229 = scalar_select %p228, %s225, 15
        %s230 = smul.addr %s227, 16
        %s231 = sadd.s32 %s229, %s230
        %s232 = smul.addr %s231, 8
        %s233 = scalar_lea.vmem %s2, %s232
        %p234 = pneg %p115
        %p235 = pneg %p112
        %p236 = pneg %p143
        %p237 = pneg %p140
        %s238 = sand.u32 %s130, 1
        %s239 = scalar_lea.sflag [#allocation7], %s238
        %s240 = sand.u32 %s130, 1
        %s241 = smul.addr %s240, 8
        %s242 = scalar_lea.vmem [#allocation6], %s241
        %p243 = scmp.lt.s32.totalorder %s22, 3
        %s244 = scalar_select %p243, %s22, 3
        %p245 = scmp.lt.s32.totalorder %s23, 0
        %s246 = scalar_select %p245, %s23, 0
        %s247 = sadd.s32 %s246, %s244
        %s248 = smul.addr %s247, 8
        %s249 = scalar_lea.vmem %s0, %s248
        %s250 = smul.u32 16, %s24
        %p251 = scmp.lt.s32.totalorder %s22, 3
        %s252 = scalar_select %p251, %s22, 3
        %p253 = scmp.lt.s32.totalorder %s250, 15
        %s254 = scalar_select %p253, %s250, 15
        %s255 = smul.addr %s252, 16
        %s256 = sadd.s32 %s254, %s255
        %s257 = smul.addr %s256, 8
        %s258 = scalar_lea.vmem %s1, %s257
        %s259 = smul.u32 16, %s24
        %s260 = smul.u32 16, %s24
        %p261 = scmp.lt.s32.totalorder %s22, 3
        %s262 = scalar_select %p261, %s22, 3
        %p263 = scmp.lt.s32.totalorder %s260, 15
        %s264 = scalar_select %p263, %s260, 15
        %s265 = smul.addr %s262, 16
        %s266 = sadd.s32 %s264, %s265
        %s267 = smul.addr %s266, 8
        %s268 = scalar_lea.vmem %s2, %s267
        %s269 = smul.u32 16, %s24
        %p270 = scmp.eq.s32.totalorder %s24, 0
        // Predicated region
        $region33: #{tpu_custom_call.1} parent=31 // pred_check
          %p271 = pneg %p270
        $region34: #{tpu_custom_call.1} parent=31 // pred_check_branch
          %273 = sbr.rel (%p271) target = $region36
        $region35: #{tpu_custom_call.1} parent=31 // pred_region
          %v274 = vld [vmem:[%s249] sm:$0xff]
          %v275 = vmul.f32 %v274, 0.17677669
          %vm276 = vcmask 261120
          %277 = vst.msk [vmem:[#allocation2] sm:$0xff] %vm276, %v275
          %278 = vst [vmem:[#allocation3] sm:$0xff] -inf
          %279 = vst [vmem:[#allocation4] sm:$0xff] 0.0
          %280 = vst.msk [vmem:[#allocation5] sm:$0xff] %vm276, 0.0
        $region36: #{tpu_custom_call.1} parent=31 // pred_fallthru
          _
        %v281 = vld [vmem:[#allocation2] sm:$0xff]
        %v282 = vld [vmem:[%s258] sm:$0xff]
        %v283 = vld [vmem:[%s258 + $0x8] sm:$0xff]
        %v284 = vld [vmem:[%s258 + $0x10] sm:$0xff]
        %v285 = vld [vmem:[%s258 + $0x18] sm:$0xff]
        %v286 = vld [vmem:[%s258 + $0x20] sm:$0xff]
        %v287 = vld [vmem:[%s258 + $0x28] sm:$0xff]
        %v288 = vld [vmem:[%s258 + $0x30] sm:$0xff]
        %v289 = vld [vmem:[%s258 + $0x38] sm:$0xff]
        %v290 = vld [vmem:[%s258 + $0x40] sm:$0xff]
        %v291 = vld [vmem:[%s258 + $0x48] sm:$0xff]
        %v292 = vld [vmem:[%s258 + $0x50] sm:$0xff]
        %v293 = vld [vmem:[%s258 + $0x58] sm:$0xff]
        %v294 = vld [vmem:[%s258 + $0x60] sm:$0xff]
        %v295 = vld [vmem:[%s258 + $0x68] sm:$0xff]
        %v296 = vld [vmem:[%s258 + $0x70] sm:$0xff]
        %v297 = vld [vmem:[%s258 + $0x78] sm:$0xff]
        %vm298 = vcmask 261120
        %v300 = vsel %vm298, %v281, 0
        %v303 = vsel %vm298, %v282, 0
        %v306 = vsel %vm298, %v283, 0
        %v309 = vsel %vm298, %v284, 0
        %v312 = vsel %vm298, %v285, 0
        %v315 = vsel %vm298, %v286, 0
        %v318 = vsel %vm298, %v287, 0
        %v321 = vsel %vm298, %v288, 0
        %v324 = vsel %vm298, %v289, 0
        %v327 = vsel %vm298, %v290, 0
        %v330 = vsel %vm298, %v291, 0
        %v333 = vsel %vm298, %v292, 0
        %v336 = vsel %vm298, %v293, 0
        %v339 = vsel %vm298, %v294, 0
        %v342 = vsel %vm298, %v295, 0
        %v345 = vsel %vm298, %v296, 0
        %v348 = vsel %vm298, %v297, 0
        %350 = vmatpush.xpose.msra.mxu0 %v348
        %351 = vmatpush.xpose.msra.mxu0 %v345
        %352 = vmatpush.xpose.msra.mxu0 %v342
        %353 = vmatpush.xpose.msra.mxu0 %v339
        %354 = vmatpush.xpose.msra.mxu0 %v336
        %355 = vmatpush.xpose.msra.mxu0 %v333
        %356 = vmatpush.xpose.msra.mxu0 %v330
        %357 = vmatpush.xpose.msra.mxu0 %v327
        %358 = vmatpush.xpose.msra.mxu0 %v324
        %359 = vmatpush.xpose.msra.mxu0 %v321
        %360 = vmatpush.xpose.msra.mxu0 %v318
        %361 = vmatpush.xpose.msra.mxu0 %v315
        %362 = vmatpush.xpose.msra.mxu0 %v312
        %363 = vmatpush.xpose.msra.mxu0 %v309
        %364 = vmatpush.xpose.msra.mxu0 %v306
        %365 = vmatpush.xpose.msra.mxu0 %v303
        %366 = vmatmul.f32.gmra.mxu0 %v300
        %v367 = vpop.f32.mrf.mxu0
        %v368 = vadd.f32 0.0, %v367
        %369 = vdwg.mxu0
        %v370 = vlaneseq
        %v371 = vand.u32 %v370, 127
        %s372 = smul.u32 %s24, 128
        %v373 = vstv %s372
        %v374 = vadd.s32 %v371, %v373
        %vm375 = vcmp.lt.s32.totalorder %v374, 8
        %v376 = vsel %vm375, %v368, -inf
        %v377 = vld [vmem:[#allocation3] sm:$0xff]
        %378 = vmax.xlane.f32.xlu0 %v376
        %v379 = vpop.xlane.xlu0 %378
        %v380 = vmax.f32 %v377, %v379
        %v381 = vsub.f32 %v377, %v380
        %v382 = vmul.f32 %v381, 1.442695
        %v383 = vpow.pop %v382
        %385 = vset.pattern.permute.xlu0 0
        %386 = vperm.xlu0 %385, %v380
        %v387 = vpop.permute.xlu0 %386
        %v389 = vsub.f32 %v376, %v387
        %v390 = vmul.f32 %v389, 1.442695
        %v391 = vpow.pop %v390
        %v392 = vld [vmem:[#allocation4] sm:$0xff]
        %v393 = vmul.f32 %v383, %v392
        %394 = vadd.xlane.f32.xlu0 %v391
        %v395 = vpop.xlane.xlu0 %394
        %v396 = vadd.f32 %v393, %v395
        %397 = vst [vmem:[#allocation4] sm:$0xff] %v396
        %v398 = vld [vmem:[#allocation5] sm:$0xff]
        %400 = vset.pattern.permute.xlu0 0
        %401 = vperm.xlu0 %400, %v383
        %v402 = vpop.permute.xlu0 %401
        %v404 = vmul.f32 %v402, %v398
        %v405 = vld [vmem:[%s268] sm:$0xff]
        %v406 = vld [vmem:[%s268 + $0x8] sm:$0xff]
        %v407 = vld [vmem:[%s268 + $0x10] sm:$0xff]
        %v408 = vld [vmem:[%s268 + $0x18] sm:$0xff]
        %v409 = vld [vmem:[%s268 + $0x20] sm:$0xff]
        %v410 = vld [vmem:[%s268 + $0x28] sm:$0xff]
        %v411 = vld [vmem:[%s268 + $0x30] sm:$0xff]
        %v412 = vld [vmem:[%s268 + $0x38] sm:$0xff]
        %v413 = vld [vmem:[%s268 + $0x40] sm:$0xff]
        %v414 = vld [vmem:[%s268 + $0x48] sm:$0xff]
        %v415 = vld [vmem:[%s268 + $0x50] sm:$0xff]
        %v416 = vld [vmem:[%s268 + $0x58] sm:$0xff]
        %v417 = vld [vmem:[%s268 + $0x60] sm:$0xff]
        %v418 = vld [vmem:[%s268 + $0x68] sm:$0xff]
        %v419 = vld [vmem:[%s268 + $0x70] sm:$0xff]
        %v420 = vld [vmem:[%s268 + $0x78] sm:$0xff]
        %421 = vmatpush.msra.mxu0 %v420
        %422 = vmatpush.msra.mxu0 %v419
        %423 = vmatpush.msra.mxu0 %v418
        %424 = vmatpush.msra.mxu0 %v417
        %425 = vmatpush.msra.mxu0 %v416
        %426 = vmatpush.msra.mxu0 %v415
        %427 = vmatpush.msra.mxu0 %v414
        %428 = vmatpush.msra.mxu0 %v413
        %429 = vmatpush.msra.mxu0 %v412
        %430 = vmatpush.msra.mxu0 %v411
        %431 = vmatpush.msra.mxu0 %v410
        %432 = vmatpush.msra.mxu0 %v409
        %433 = vmatpush.msra.mxu0 %v408
        %434 = vmatpush.msra.mxu0 %v407
        %435 = vmatpush.msra.mxu0 %v406
        %436 = vmatpush.msra.mxu0 %v405
        %437 = vmatmul.f32.gmra.mxu0 %v391
        %v438 = vpop.f32.mrf.mxu0
        %v439 = vadd.f32 0.0, %v438
        %440 = vdwg.mxu0
        %v441 = vadd.f32 %v404, %v439
        %442 = vst.msk [vmem:[#allocation5] sm:$0xff] %vm298, %v441
        %443 = vst [vmem:[#allocation3] sm:$0xff] %v380
        // Predicated region
        $region37: #{tpu_custom_call.1} parent=31 // pred_check
          %p444 = pneg %p270
        $region38: #{tpu_custom_call.1} parent=31 // pred_check_branch
          %446 = sbr.rel (%p444) target = $region40
        $region39: #{tpu_custom_call.1} parent=31 // pred_region
          %v447 = vld [vmem:[#allocation4] sm:$0xff]
          %v448 = vrcp.pop %v447
          %v449 = vld [vmem:[#allocation5] sm:$0xff]
          %451 = vset.pattern.permute.xlu0 0
          %452 = vperm.xlu0 %451, %v448
          %v453 = vpop.permute.xlu0 %452
          %v455 = vmul.f32 %v449, %v453
          %456 = vst.msk [vmem:[%s242] sm:$0xff] %vm298, %v455
        $region40: #{tpu_custom_call.1} parent=31 // pred_fallthru
          _
        %s457 = sand.u32 %s130, 1
        %s458 = scalar_lea.sflag [#allocation7], %s457
        %s459 = sand.u32 %s130, 1
        %s460 = smul.addr %s459, 8
        %s461 = scalar_lea.vmem [#allocation6], %s460
        // Predicated region
        $region41: #{tpu_custom_call.1} parent=31 // pred_check
          %p462 = pneg %p140
        $region42: #{tpu_custom_call.1} parent=31 // pred_check_branch
          %464 = sbr.rel (%p462) target = $region44
        $region43: #{tpu_custom_call.1} parent=31 // pred_region
          %466 = vsyncadd %s458, 0
          %s467 = sadd.s32 %s23, %s22
          %s468 = smul.addr %s467, 8
          %s469 = scalar_lea.hbm %s3, %s468
          %s471 = sshll.u32 %s461, 4
          %s472 = int_to_ptr.vmem [resolvable:$true] %s471
          %s473 = sshll.u32 %s469, 4
          %s474 = int_to_ptr.hbm [resolvable:$true] %s473
          %476 = dma.vmem_to_hbm [thread:$0]  %s472, 128, %s474, %s458
        $region44: #{tpu_custom_call.1} parent=31 // pred_fallthru
          _
      $region32: #{tpu_custom_call.1} parent=5 // pred_fallthru
        _
      %p477 = scmp.le.s32.totalorder 2, %s12
      // Predicated region
      $region45: #{tpu_custom_call.1} parent=5 // pred_check
        %p478 = pneg %p477
      $region46: #{tpu_custom_call.1} parent=5 // pred_check_branch
        %480 = sbr.rel (%p478) target = $region48
      $region47: #{tpu_custom_call.1} parent=5 // pred_region
        %s481 = ssub.s32 %s12, 2
        // Predicated region
        $region49: #{tpu_custom_call.1} parent=47 // pred_check
          %p482 = pneg %p146
        $region50: #{tpu_custom_call.1} parent=47 // pred_check_branch
          %484 = sbr.rel (%p482) target = $region52
        $region51: #{tpu_custom_call.1} parent=47 // pred_region
          %s485 = sand.u32 %s131, 1
          %s486 = scalar_lea.sflag [#allocation7], %s485
          %s487 = sand.u32 %s131, 1
          %s488 = smul.addr %s487, 8
          %s489 = scalar_lea.vmem [#allocation6], %s488
          %491 = dma.done %s486, 128
        $region52: #{tpu_custom_call.1} parent=47 // pred_fallthru
          _
      $region48: #{tpu_custom_call.1} parent=5 // pred_fallthru
        _
    $region6: #{tpu_custom_call.1} parent=1 // loop_footer
      %s16 = sadd.s32 1, %s12
    $region7: #{tpu_custom_call.1} parent=1 // loop_footer_branch
      %11 = sbr.rel target = $region3
    $region8: #{tpu_custom_call.1} parent=1 // loop_exit
      _
    %492 = vsyncpa [#allocation7], 1
    %s493 = scalar_lea.sflag [#allocation7], 1
    %494 = vsyncpa %s493, 1

</llo_original>
